<compile_context>
chip_gen: v7x
topology: tpu7x:2x2x1
jax: 0.10.0
libtpu: 0.0.40
codegen_flags: <defaults>
</compile_context>

<pallas_src>
import functools
import numpy as np
import jax
import jax.numpy as jnp
from jax import lax
from jax.experimental import pallas as pl
from jax.experimental.pallas import tpu as pltpu


def _round_up(x, m):
    return (x + m - 1) // m * m


def create_kernel(radius=1.0, circular=True, distance_weighted=True,
                  hole=True, sigma=2.0, normalised=False):
    """Host-side (numpy) spatial kernel (buteo-style gaussian kernel)."""
    size = int(np.ceil(radius)) * 2 + 1
    c = size // 2
    yy, xx = np.mgrid[0:size, 0:size]
    dist = np.sqrt((yy - c) ** 2 + (xx - c) ** 2)
    if distance_weighted:
        k = np.exp(-(dist ** 2) / (2.0 * sigma ** 2))
    else:
        k = np.ones((size, size), dtype=np.float64)
    if circular:
        k = np.where(dist <= radius + 1e-9, k, 0.0)
    if hole:
        k[c, c] = 0.0
    if normalised and k.sum() > 0.0:
        k = k / k.sum()
    return k.astype(np.float32)


def _spatial_hot_kernel(tpad_ref, out_ref, *, classes, taps, method,
                        half_weight, eps, tile_h, w_lane, p):
    """One grid step = one (C, tile_h, w_lane) output row-tile.

    tpad_ref : full padded int32 class map (Hp_in, Wp_in), resident in VMEM
    out_ref  : (C, tile_h, w_lane) float32 soft labels for this row tile
    classes  : tuple of python ints (static)
    taps     : tuple of (di, dj, weight), weight != 0 (static)
    """
    row0 = pl.multiple_of(pl.program_id(0) * tile_h, tile_h)
    # Halo rows for this tile (aligned dynamic sublane start).
    tblk = tpad_ref[pl.ds(row0, tile_h + 2 * p), :]            # (tile_h+2p, Wp_in)

    # Hoisted, class-independent shifted views of the class map (taps + center).
    shifted = tuple(
        (jnp.float32(w), lax.slice(tblk, (di, dj), (di + tile_h, dj + w_lane)))
        for (di, dj, w) in taps)
    center = lax.slice(tblk, (p, p), (p + tile_h, p + w_lane))  # int32

    half_w = jnp.float32(half_weight)
    denom = jnp.zeros((tile_h, w_lane), jnp.float32)

    # Pass 1: write un-normalised per-class planes, accumulate the denominator.
    for ci, cls_val in enumerate(classes):
        acc = jnp.zeros((tile_h, w_lane), jnp.float32)
        for (w, sh) in shifted:                                  # VPU compare+select+add
            acc = acc + jnp.where(sh == cls_val, w, jnp.float32(0.0))
        if method == 'half':
            acc = jnp.where(center == cls_val, half_w, acc)
        out_ref[ci, :, :] = acc
        denom = denom + acc

    # Pass 2: one reciprocal, C multiplies.
    recip = pl.reciprocal(jnp.maximum(denom, jnp.float32(eps)))
    for ci in range(len(classes)):
        out_ref[ci, :, :] = out_ref[ci, :, :] * recip


class SpatialHOT:
    """Pallas port of the PyTorch SpatialHOT module (method='half' path)."""

    def __init__(self, method='half', classes=None, kernel_radius=1.0,
                 kernel_circular=True, kernel_sigma=2.0, epsilon=1e-07,
                 channel_last=False):
        assert method in ['half', 'kernel_half', 'max', None]
        assert isinstance(classes, list) and len(classes) > 1
        assert classes == sorted(classes)
        assert method != 'max', "method='max' not implemented in the Pallas port"
        self.method = method
        self.channel_last = channel_last
        self.eps = float(epsilon)
        self.classes = tuple(int(c) for c in classes)
        self.classes_count = len(classes)
        self.kernel_np = create_kernel(
            radius=kernel_radius, circular=kernel_circular,
            distance_weighted=True,
            hole=False if method in [None, 'max'] else True,
            sigma=kernel_sigma, normalised=False)
        self.kernel_size = self.kernel_np.size
        self.kernel_width = self.kernel_np.shape[1]
        self.strength = self.kernel_size / (self.kernel_size - 1.0)
        if method == 'kernel_half':
            kh, kw = self.kernel_np.shape
            self.kernel_np[kh // 2, kw // 2] = self.kernel_np.sum() * self.strength
        self.padding = (self.kernel_np.shape[0] - 1) // 2
        self.half_weight = float(self.kernel_np.sum() * self.strength)
        kh, kw = self.kernel_np.shape
        self.taps = tuple(
            (di, dj, float(self.kernel_np[di, dj]))
            for di in range(kh) for dj in range(kw)
            if float(self.kernel_np[di, dj]) != 0.0)

    def _choose_tile_h(self, H, w_lane):
        # Double-buffered output block should stay within ~8 MiB of VMEM.
        per_row = 2 * self.classes_count * w_lane * 4
        th = (8 << 20) // max(per_row, 1)
        th = max(8, min(512, (th // 8) * 8))
        return min(th, _round_up(H, 8))

    def __call__(self, target, tile_h=None):
        """target: (H, W) integer class map -> (C, H, W) float32 soft labels."""
        H, W = target.shape
        p = self.padding
        C = self.classes_count

        w_lane = _round_up(W, 128)                       # lane-dense output width
        if tile_h is None:
            tile_h = self._choose_tile_h(H, w_lane)
        tile_h = max(8, (int(tile_h) // 8) * 8)
        tile_h = min(tile_h, _round_up(H, 8))
        H_grid = _round_up(H, tile_h)

        Hp_in = _round_up(H_grid + 2 * p, 8)
        Wp_in = _round_up(w_lane + 2 * p, 128)           # lane-dense input width

        # Replicate ("edge") halo + alignment padding in one go, int32 kept.
        tpad = jnp.pad(target.astype(jnp.int32),
                       ((p, Hp_in - H - p), (p, Wp_in - W - p)), mode='edge')

        kernel = functools.partial(
            _spatial_hot_kernel,
            classes=self.classes, taps=self.taps, method=self.method,
            half_weight=self.half_weight, eps=self.eps,
            tile_h=tile_h, w_lane=w_lane, p=p)

        # Explicit scoped-VMEM budget: resident input + double-buffered output
        # block + shifted temporaries, with headroom (v7x physical VMEM = 64 MiB).
        in_bytes = Hp_in * Wp_in * 4
        out_blk = C * tile_h * w_lane * 4
        halo_tmp = (len(self.taps) + 2) * (tile_h + 2 * p) * Wp_in * 4
        vmem_limit = int(min(100 << 20,
                             max(8 << 20,
                                 2 * (2 * out_blk + 2 * in_bytes + halo_tmp)
                                 + (2 << 20))))

        out = pl.pallas_call(
            kernel,
            out_shape=jax.ShapeDtypeStruct((C, H_grid, w_lane), jnp.float32),
            grid_spec=pltpu.PrefetchScalarGridSpec(
                num_scalar_prefetch=0,
                grid=(H_grid // tile_h,),
                in_specs=[pl.BlockSpec((Hp_in, Wp_in), lambda i: (0, 0))],
                out_specs=pl.BlockSpec((C, tile_h, w_lane), lambda i: (0, i, 0)),
            ),
            compiler_params=pltpu.CompilerParams(
                dimension_semantics=("parallel",),
                vmem_limit_bytes=vmem_limit),
        )(tpad)
        return out[:, :H, :W]


def spatial_hot_ref(target, mod):
    """Plain-JAX reference mirroring the torch ops (pad -> conv2d -> where -> crop -> normalize)."""
    C, p = mod.classes_count, mod.padding
    cls = jnp.asarray(mod.classes, jnp.float32).reshape(1, C, 1, 1)
    t = target.astype(jnp.float32)[None, None, :, :]                 # (1,1,H,W)
    target_hot = (t == cls).astype(jnp.float32)                      # (1,C,H,W)
    target_hot_pad = jnp.pad(target_hot, ((0, 0), (0, 0), (p, p), (p, p)),
                             mode='edge')                            # (1,C,Hp,Wp)
    weights = jnp.asarray(mod.kernel_np, jnp.float32)
    weights = jnp.tile(weights[None, None], (C, 1, 1, 1))            # (C,1,kh,kw)
    convolved = lax.conv_general_dilated(
        target_hot_pad, weights, window_strides=(1, 1),
        padding=[(p, p), (p, p)], feature_group_count=C,
        dimension_numbers=('NCHW', 'OIHW', 'NCHW'))                  # (1,C,Hp,Wp)
    if mod.method == 'half':
        convolved = jnp.where(target_hot_pad == 1.0, mod.half_weight, convolved)
    convolved = convolved[:, :, p:-p, p:-p]
    denom = jnp.maximum(convolved.sum(axis=1, keepdims=True), mod.eps)
    return jnp.squeeze(convolved / denom)


if __name__ == "__main__":
    key = jax.random.PRNGKey(0)
    classes = [10, 20, 30, 40]          # 4 classes (ESA-WorldCover-like ids)
    H = W = 16
    idx = jax.random.randint(key, (H, W), 0, len(classes))
    target = jnp.asarray(classes, jnp.int32)[idx]          # (H, W) class map

    mod = SpatialHOT(method='half', classes=classes)
    ref = spatial_hot_ref(target, mod)

    # Auto-tiled path (single row tile at this toy size).
    out_auto = jax.block_until_ready(mod(target))
    # Forced 8-row tiles -> grid=(2,), exercises the pipelined multi-step path.
    out_tiled = jax.block_until_ready(mod(target, tile_h=8))

    assert out_auto.shape == (len(classes), H, W), out_auto.shape
    assert jnp.allclose(out_auto, ref, rtol=1e-5, atol=1e-6), (
        float(jnp.max(jnp.abs(out_auto - ref))))
    assert jnp.allclose(out_tiled, ref, rtol=1e-5, atol=1e-6), (
        float(jnp.max(jnp.abs(out_tiled - ref))))
    print("KERNEL_OK")
</pallas_src>

<mosaic_0001>
module attributes {stable_mosaic.version = 11 : i64} {
  func.func @_spatial_hot_kernel(%arg0: i32, %arg1: memref<24x256xi32, #tpu.memory_space<vmem>>, %arg2: memref<4x16x128xf32, #tpu.memory_space<vmem>>) attributes {dimension_semantics = [#tpu.dimension_semantics<parallel>], iteration_bounds = array<i64: 1>, scalar_prefetch = 0 : i64, scratch_operands = 0 : i64, tpu.core_type = #tpu.core_type<tc>, window_params = [{pipeline_mode = #tpu.pipeline_mode<synchronous>, transform_indices = @transform_0, window_bounds = array<i64: 24, 256>}, {transform_indices = @transform_1, window_bounds = array<i64: 4, 16, 128>}]} {
    %c16_i32 = arith.constant 16 : i32
    %0 = arith.muli %arg0, %c16_i32 : i32
    %1 = tpu.assume_multiple %0, 16 : i32
    %2 = arith.index_cast %1 : i32 to index
    %c0 = arith.constant 0 : index
    %3 = vector.load %arg1[%2, %c0] : memref<24x256xi32, #tpu.memory_space<vmem>>, vector<18x256xi32>
    %4 = vector.extract_strided_slice %3 {offsets = [0, 1], sizes = [16, 128], strides = [1, 1]} : vector<18x256xi32> to vector<16x128xi32>
    %5 = vector.extract_strided_slice %3 {offsets = [1, 0], sizes = [16, 128], strides = [1, 1]} : vector<18x256xi32> to vector<16x128xi32>
    %6 = vector.extract_strided_slice %3 {offsets = [1, 2], sizes = [16, 128], strides = [1, 1]} : vector<18x256xi32> to vector<16x128xi32>
    %7 = vector.extract_strided_slice %3 {offsets = [2, 1], sizes = [16, 128], strides = [1, 1]} : vector<18x256xi32> to vector<16x128xi32>
    %8 = vector.extract_strided_slice %3 {offsets = [1, 1], sizes = [16, 128], strides = [1, 1]} : vector<18x256xi32> to vector<16x128xi32>
    %cst = arith.constant 0.000000e+00 : f32
    %9 = vector.broadcast %cst : f32 to vector<16x128xf32>
    %cst_0 = arith.constant 0.000000e+00 : f32
    %10 = vector.broadcast %cst_0 : f32 to vector<16x128xf32>
    %c10_i32 = arith.constant 10 : i32
    %11 = vector.broadcast %c10_i32 : i32 to vector<16x128xi32>
    %12 = arith.cmpi eq, %4, %11 : vector<16x128xi32>
    %cst_1 = arith.constant 0.882496893 : f32
    %cst_2 = arith.constant 0.000000e+00 : f32
    %13 = vector.broadcast %cst_1 : f32 to vector<16x128xf32>
    %14 = vector.broadcast %cst_2 : f32 to vector<16x128xf32>
    %15 = arith.select %12, %13, %14 : vector<16x128xi1>, vector<16x128xf32>
    %16 = arith.addf %10, %15 : vector<16x128xf32>
    %c10_i32_3 = arith.constant 10 : i32
    %17 = vector.broadcast %c10_i32_3 : i32 to vector<16x128xi32>
    %18 = arith.cmpi eq, %5, %17 : vector<16x128xi32>
    %cst_4 = arith.constant 0.882496893 : f32
    %cst_5 = arith.constant 0.000000e+00 : f32
    %19 = vector.broadcast %cst_4 : f32 to vector<16x128xf32>
    %20 = vector.broadcast %cst_5 : f32 to vector<16x128xf32>
    %21 = arith.select %18, %19, %20 : vector<16x128xi1>, vector<16x128xf32>
    %22 = arith.addf %16, %21 : vector<16x128xf32>
    %c10_i32_6 = arith.constant 10 : i32
    %23 = vector.broadcast %c10_i32_6 : i32 to vector<16x128xi32>
    %24 = arith.cmpi eq, %6, %23 : vector<16x128xi32>
    %cst_7 = arith.constant 0.882496893 : f32
    %cst_8 = arith.constant 0.000000e+00 : f32
    %25 = vector.broadcast %cst_7 : f32 to vector<16x128xf32>
    %26 = vector.broadcast %cst_8 : f32 to vector<16x128xf32>
    %27 = arith.select %24, %25, %26 : vector<16x128xi1>, vector<16x128xf32>
    %28 = arith.addf %22, %27 : vector<16x128xf32>
    %c10_i32_9 = arith.constant 10 : i32
    %29 = vector.broadcast %c10_i32_9 : i32 to vector<16x128xi32>
    %30 = arith.cmpi eq, %7, %29 : vector<16x128xi32>
    %cst_10 = arith.constant 0.882496893 : f32
    %cst_11 = arith.constant 0.000000e+00 : f32
    %31 = vector.broadcast %cst_10 : f32 to vector<16x128xf32>
    %32 = vector.broadcast %cst_11 : f32 to vector<16x128xf32>
    %33 = arith.select %30, %31, %32 : vector<16x128xi1>, vector<16x128xf32>
    %34 = arith.addf %28, %33 : vector<16x128xf32>
    %c10_i32_12 = arith.constant 10 : i32
    %35 = vector.broadcast %c10_i32_12 : i32 to vector<16x128xi32>
    %36 = arith.cmpi eq, %8, %35 : vector<16x128xi32>
    %cst_13 = arith.constant 3.97123599 : f32
    %37 = vector.broadcast %cst_13 : f32 to vector<16x128xf32>
    %38 = arith.select %36, %37, %34 : vector<16x128xi1>, vector<16x128xf32>
    %c0_14 = arith.constant 0 : index
    %c0_15 = arith.constant 0 : index
    %c0_16 = arith.constant 0 : index
    %39 = vector.load %arg2[%c0_14, %c0_15, %c0_16] : memref<4x16x128xf32, #tpu.memory_space<vmem>>, vector<1x16x128xf32>
    %40 = vector.shape_cast %39 : vector<1x16x128xf32> to vector<16x128xf32>
    %41 = vector.shape_cast %38 : vector<16x128xf32> to vector<1x16x128xf32>
    tpu.vector_store %arg2[%c0_14, %c0_15, %c0_16], %41 {strides = array<i32>} : memref<4x16x128xf32, #tpu.memory_space<vmem>>, vector<1x16x128xf32>,
    %42 = arith.addf %9, %38 : vector<16x128xf32>
    %cst_17 = arith.constant 0.000000e+00 : f32
    %43 = vector.broadcast %cst_17 : f32 to vector<16x128xf32>
    %c20_i32 = arith.constant 20 : i32
    %44 = vector.broadcast %c20_i32 : i32 to vector<16x128xi32>
    %45 = arith.cmpi eq, %4, %44 : vector<16x128xi32>
    %cst_18 = arith.constant 0.882496893 : f32
    %cst_19 = arith.constant 0.000000e+00 : f32
    %46 = vector.broadcast %cst_18 : f32 to vector<16x128xf32>
    %47 = vector.broadcast %cst_19 : f32 to vector<16x128xf32>
    %48 = arith.select %45, %46, %47 : vector<16x128xi1>, vector<16x128xf32>
    %49 = arith.addf %43, %48 : vector<16x128xf32>
    %c20_i32_20 = arith.constant 20 : i32
    %50 = vector.broadcast %c20_i32_20 : i32 to vector<16x128xi32>
    %51 = arith.cmpi eq, %5, %50 : vector<16x128xi32>
    %cst_21 = arith.constant 0.882496893 : f32
    %cst_22 = arith.constant 0.000000e+00 : f32
    %52 = vector.broadcast %cst_21 : f32 to vector<16x128xf32>
    %53 = vector.broadcast %cst_22 : f32 to vector<16x128xf32>
    %54 = arith.select %51, %52, %53 : vector<16x128xi1>, vector<16x128xf32>
    %55 = arith.addf %49, %54 : vector<16x128xf32>
    %c20_i32_23 = arith.constant 20 : i32
    %56 = vector.broadcast %c20_i32_23 : i32 to vector<16x128xi32>
    %57 = arith.cmpi eq, %6, %56 : vector<16x128xi32>
    %cst_24 = arith.constant 0.882496893 : f32
    %cst_25 = arith.constant 0.000000e+00 : f32
    %58 = vector.broadcast %cst_24 : f32 to vector<16x128xf32>
    %59 = vector.broadcast %cst_25 : f32 to vector<16x128xf32>
    %60 = arith.select %57, %58, %59 : vector<16x128xi1>, vector<16x128xf32>
    %61 = arith.addf %55, %60 : vector<16x128xf32>
    %c20_i32_26 = arith.constant 20 : i32
    %62 = vector.broadcast %c20_i32_26 : i32 to vector<16x128xi32>
    %63 = arith.cmpi eq, %7, %62 : vector<16x128xi32>
    %cst_27 = arith.constant 0.882496893 : f32
    %cst_28 = arith.constant 0.000000e+00 : f32
    %64 = vector.broadcast %cst_27 : f32 to vector<16x128xf32>
    %65 = vector.broadcast %cst_28 : f32 to vector<16x128xf32>
    %66 = arith.select %63, %64, %65 : vector<16x128xi1>, vector<16x128xf32>
    %67 = arith.addf %61, %66 : vector<16x128xf32>
    %c20_i32_29 = arith.constant 20 : i32
    %68 = vector.broadcast %c20_i32_29 : i32 to vector<16x128xi32>
    %69 = arith.cmpi eq, %8, %68 : vector<16x128xi32>
    %cst_30 = arith.constant 3.97123599 : f32
    %70 = vector.broadcast %cst_30 : f32 to vector<16x128xf32>
    %71 = arith.select %69, %70, %67 : vector<16x128xi1>, vector<16x128xf32>
    %c1 = arith.constant 1 : index
    %c0_31 = arith.constant 0 : index
    %c0_32 = arith.constant 0 : index
    %72 = vector.load %arg2[%c1, %c0_31, %c0_32] : memref<4x16x128xf32, #tpu.memory_space<vmem>>, vector<1x16x128xf32>
    %73 = vector.shape_cast %72 : vector<1x16x128xf32> to vector<16x128xf32>
    %74 = vector.shape_cast %71 : vector<16x128xf32> to vector<1x16x128xf32>
    tpu.vector_store %arg2[%c1, %c0_31, %c0_32], %74 {strides = array<i32>} : memref<4x16x128xf32, #tpu.memory_space<vmem>>, vector<1x16x128xf32>,
    %75 = arith.addf %42, %71 : vector<16x128xf32>
    %cst_33 = arith.constant 0.000000e+00 : f32
    %76 = vector.broadcast %cst_33 : f32 to vector<16x128xf32>
    %c30_i32 = arith.constant 30 : i32
    %77 = vector.broadcast %c30_i32 : i32 to vector<16x128xi32>
    %78 = arith.cmpi eq, %4, %77 : vector<16x128xi32>
    %cst_34 = arith.constant 0.882496893 : f32
    %cst_35 = arith.constant 0.000000e+00 : f32
    %79 = vector.broadcast %cst_34 : f32 to vector<16x128xf32>
    %80 = vector.broadcast %cst_35 : f32 to vector<16x128xf32>
    %81 = arith.select %78, %79, %80 : vector<16x128xi1>, vector<16x128xf32>
    %82 = arith.addf %76, %81 : vector<16x128xf32>
    %c30_i32_36 = arith.constant 30 : i32
    %83 = vector.broadcast %c30_i32_36 : i32 to vector<16x128xi32>
    %84 = arith.cmpi eq, %5, %83 : vector<16x128xi32>
    %cst_37 = arith.constant 0.882496893 : f32
    %cst_38 = arith.constant 0.000000e+00 : f32
    %85 = vector.broadcast %cst_37 : f32 to vector<16x128xf32>
    %86 = vector.broadcast %cst_38 : f32 to vector<16x128xf32>
    %87 = arith.select %84, %85, %86 : vector<16x128xi1>, vector<16x128xf32>
    %88 = arith.addf %82, %87 : vector<16x128xf32>
    %c30_i32_39 = arith.constant 30 : i32
    %89 = vector.broadcast %c30_i32_39 : i32 to vector<16x128xi32>
    %90 = arith.cmpi eq, %6, %89 : vector<16x128xi32>
    %cst_40 = arith.constant 0.882496893 : f32
    %cst_41 = arith.constant 0.000000e+00 : f32
    %91 = vector.broadcast %cst_40 : f32 to vector<16x128xf32>
    %92 = vector.broadcast %cst_41 : f32 to vector<16x128xf32>
    %93 = arith.select %90, %91, %92 : vector<16x128xi1>, vector<16x128xf32>
    %94 = arith.addf %88, %93 : vector<16x128xf32>
    %c30_i32_42 = arith.constant 30 : i32
    %95 = vector.broadcast %c30_i32_42 : i32 to vector<16x128xi32>
    %96 = arith.cmpi eq, %7, %95 : vector<16x128xi32>
    %cst_43 = arith.constant 0.882496893 : f32
    %cst_44 = arith.constant 0.000000e+00 : f32
    %97 = vector.broadcast %cst_43 : f32 to vector<16x128xf32>
    %98 = vector.broadcast %cst_44 : f32 to vector<16x128xf32>
    %99 = arith.select %96, %97, %98 : vector<16x128xi1>, vector<16x128xf32>
    %100 = arith.addf %94, %99 : vector<16x128xf32>
    %c30_i32_45 = arith.constant 30 : i32
    %101 = vector.broadcast %c30_i32_45 : i32 to vector<16x128xi32>
    %102 = arith.cmpi eq, %8, %101 : vector<16x128xi32>
    %cst_46 = arith.constant 3.97123599 : f32
    %103 = vector.broadcast %cst_46 : f32 to vector<16x128xf32>
    %104 = arith.select %102, %103, %100 : vector<16x128xi1>, vector<16x128xf32>
    %c2 = arith.constant 2 : index
    %c0_47 = arith.constant 0 : index
    %c0_48 = arith.constant 0 : index
    %105 = vector.load %arg2[%c2, %c0_47, %c0_48] : memref<4x16x128xf32, #tpu.memory_space<vmem>>, vector<1x16x128xf32>
    %106 = vector.shape_cast %105 : vector<1x16x128xf32> to vector<16x128xf32>
    %107 = vector.shape_cast %104 : vector<16x128xf32> to vector<1x16x128xf32>
    tpu.vector_store %arg2[%c2, %c0_47, %c0_48], %107 {strides = array<i32>} : memref<4x16x128xf32, #tpu.memory_space<vmem>>, vector<1x16x128xf32>,
    %108 = arith.addf %75, %104 : vector<16x128xf32>
    %cst_49 = arith.constant 0.000000e+00 : f32
    %109 = vector.broadcast %cst_49 : f32 to vector<16x128xf32>
    %c40_i32 = arith.constant 40 : i32
    %110 = vector.broadcast %c40_i32 : i32 to vector<16x128xi32>
    %111 = arith.cmpi eq, %4, %110 : vector<16x128xi32>
    %cst_50 = arith.constant 0.882496893 : f32
    %cst_51 = arith.constant 0.000000e+00 : f32
    %112 = vector.broadcast %cst_50 : f32 to vector<16x128xf32>
    %113 = vector.broadcast %cst_51 : f32 to vector<16x128xf32>
    %114 = arith.select %111, %112, %113 : vector<16x128xi1>, vector<16x128xf32>
    %115 = arith.addf %109, %114 : vector<16x128xf32>
    %c40_i32_52 = arith.constant 40 : i32
    %116 = vector.broadcast %c40_i32_52 : i32 to vector<16x128xi32>
    %117 = arith.cmpi eq, %5, %116 : vector<16x128xi32>
    %cst_53 = arith.constant 0.882496893 : f32
    %cst_54 = arith.constant 0.000000e+00 : f32
    %118 = vector.broadcast %cst_53 : f32 to vector<16x128xf32>
    %119 = vector.broadcast %cst_54 : f32 to vector<16x128xf32>
    %120 = arith.select %117, %118, %119 : vector<16x128xi1>, vector<16x128xf32>
    %121 = arith.addf %115, %120 : vector<16x128xf32>
    %c40_i32_55 = arith.constant 40 : i32
    %122 = vector.broadcast %c40_i32_55 : i32 to vector<16x128xi32>
    %123 = arith.cmpi eq, %6, %122 : vector<16x128xi32>
    %cst_56 = arith.constant 0.882496893 : f32
    %cst_57 = arith.constant 0.000000e+00 : f32
    %124 = vector.broadcast %cst_56 : f32 to vector<16x128xf32>
    %125 = vector.broadcast %cst_57 : f32 to vector<16x128xf32>
    %126 = arith.select %123, %124, %125 : vector<16x128xi1>, vector<16x128xf32>
    %127 = arith.addf %121, %126 : vector<16x128xf32>
    %c40_i32_58 = arith.constant 40 : i32
    %128 = vector.broadcast %c40_i32_58 : i32 to vector<16x128xi32>
    %129 = arith.cmpi eq, %7, %128 : vector<16x128xi32>
    %cst_59 = arith.constant 0.882496893 : f32
    %cst_60 = arith.constant 0.000000e+00 : f32
    %130 = vector.broadcast %cst_59 : f32 to vector<16x128xf32>
    %131 = vector.broadcast %cst_60 : f32 to vector<16x128xf32>
    %132 = arith.select %129, %130, %131 : vector<16x128xi1>, vector<16x128xf32>
    %133 = arith.addf %127, %132 : vector<16x128xf32>
    %c40_i32_61 = arith.constant 40 : i32
    %134 = vector.broadcast %c40_i32_61 : i32 to vector<16x128xi32>
    %135 = arith.cmpi eq, %8, %134 : vector<16x128xi32>
    %cst_62 = arith.constant 3.97123599 : f32
    %136 = vector.broadcast %cst_62 : f32 to vector<16x128xf32>
    %137 = arith.select %135, %136, %133 : vector<16x128xi1>, vector<16x128xf32>
    %c3 = arith.constant 3 : index
    %c0_63 = arith.constant 0 : index
    %c0_64 = arith.constant 0 : index
    %138 = vector.load %arg2[%c3, %c0_63, %c0_64] : memref<4x16x128xf32, #tpu.memory_space<vmem>>, vector<1x16x128xf32>
    %139 = vector.shape_cast %138 : vector<1x16x128xf32> to vector<16x128xf32>
    %140 = vector.shape_cast %137 : vector<16x128xf32> to vector<1x16x128xf32>
    tpu.vector_store %arg2[%c3, %c0_63, %c0_64], %140 {strides = array<i32>} : memref<4x16x128xf32, #tpu.memory_space<vmem>>, vector<1x16x128xf32>,
    %141 = arith.addf %108, %137 : vector<16x128xf32>
    %cst_65 = arith.constant 1.000000e-07 : f32
    %142 = vector.broadcast %cst_65 : f32 to vector<16x128xf32>
    %143 = arith.maximumf %141, %142 : vector<16x128xf32>
    %144 = tpu.reciprocal %143 : vector<16x128xf32> -> vector<16x128xf32>
    %c0_66 = arith.constant 0 : index
    %c0_67 = arith.constant 0 : index
    %c0_68 = arith.constant 0 : index
    %145 = vector.load %arg2[%c0_66, %c0_67, %c0_68] : memref<4x16x128xf32, #tpu.memory_space<vmem>>, vector<1x16x128xf32>
    %146 = vector.shape_cast %145 : vector<1x16x128xf32> to vector<16x128xf32>
    %147 = arith.mulf %146, %144 : vector<16x128xf32>
    %c0_69 = arith.constant 0 : index
    %c0_70 = arith.constant 0 : index
    %c0_71 = arith.constant 0 : index
    %148 = vector.load %arg2[%c0_69, %c0_70, %c0_71] : memref<4x16x128xf32, #tpu.memory_space<vmem>>, vector<1x16x128xf32>
    %149 = vector.shape_cast %148 : vector<1x16x128xf32> to vector<16x128xf32>
    %150 = vector.shape_cast %147 : vector<16x128xf32> to vector<1x16x128xf32>
    tpu.vector_store %arg2[%c0_69, %c0_70, %c0_71], %150 {strides = array<i32>} : memref<4x16x128xf32, #tpu.memory_space<vmem>>, vector<1x16x128xf32>,
    %c1_72 = arith.constant 1 : index
    %c0_73 = arith.constant 0 : index
    %c0_74 = arith.constant 0 : index
    %151 = vector.load %arg2[%c1_72, %c0_73, %c0_74] : memref<4x16x128xf32, #tpu.memory_space<vmem>>, vector<1x16x128xf32>
    %152 = vector.shape_cast %151 : vector<1x16x128xf32> to vector<16x128xf32>
    %153 = arith.mulf %152, %144 : vector<16x128xf32>
    %c1_75 = arith.constant 1 : index
    %c0_76 = arith.constant 0 : index
    %c0_77 = arith.constant 0 : index
    %154 = vector.load %arg2[%c1_75, %c0_76, %c0_77] : memref<4x16x128xf32, #tpu.memory_space<vmem>>, vector<1x16x128xf32>
    %155 = vector.shape_cast %154 : vector<1x16x128xf32> to vector<16x128xf32>
    %156 = vector.shape_cast %153 : vector<16x128xf32> to vector<1x16x128xf32>
    tpu.vector_store %arg2[%c1_75, %c0_76, %c0_77], %156 {strides = array<i32>} : memref<4x16x128xf32, #tpu.memory_space<vmem>>, vector<1x16x128xf32>,
    %c2_78 = arith.constant 2 : index
    %c0_79 = arith.constant 0 : index
    %c0_80 = arith.constant 0 : index
    %157 = vector.load %arg2[%c2_78, %c0_79, %c0_80] : memref<4x16x128xf32, #tpu.memory_space<vmem>>, vector<1x16x128xf32>
    %158 = vector.shape_cast %157 : vector<1x16x128xf32> to vector<16x128xf32>
    %159 = arith.mulf %158, %144 : vector<16x128xf32>
    %c2_81 = arith.constant 2 : index
    %c0_82 = arith.constant 0 : index
    %c0_83 = arith.constant 0 : index
    %160 = vector.load %arg2[%c2_81, %c0_82, %c0_83] : memref<4x16x128xf32, #tpu.memory_space<vmem>>, vector<1x16x128xf32>
    %161 = vector.shape_cast %160 : vector<1x16x128xf32> to vector<16x128xf32>
    %162 = vector.shape_cast %159 : vector<16x128xf32> to vector<1x16x128xf32>
    tpu.vector_store %arg2[%c2_81, %c0_82, %c0_83], %162 {strides = array<i32>} : memref<4x16x128xf32, #tpu.memory_space<vmem>>, vector<1x16x128xf32>,
    %c3_84 = arith.constant 3 : index
    %c0_85 = arith.constant 0 : index
    %c0_86 = arith.constant 0 : index
    %163 = vector.load %arg2[%c3_84, %c0_85, %c0_86] : memref<4x16x128xf32, #tpu.memory_space<vmem>>, vector<1x16x128xf32>
    %164 = vector.shape_cast %163 : vector<1x16x128xf32> to vector<16x128xf32>
    %165 = arith.mulf %164, %144 : vector<16x128xf32>
    %c3_87 = arith.constant 3 : index
    %c0_88 = arith.constant 0 : index
    %c0_89 = arith.constant 0 : index
    %166 = vector.load %arg2[%c3_87, %c0_88, %c0_89] : memref<4x16x128xf32, #tpu.memory_space<vmem>>, vector<1x16x128xf32>
    %167 = vector.shape_cast %166 : vector<1x16x128xf32> to vector<16x128xf32>
    %168 = vector.shape_cast %165 : vector<16x128xf32> to vector<1x16x128xf32>
    tpu.vector_store %arg2[%c3_87, %c0_88, %c0_89], %168 {strides = array<i32>} : memref<4x16x128xf32, #tpu.memory_space<vmem>>, vector<1x16x128xf32>,
    return
  }
  func.func @transform_0(%arg0: i32) -> (i32, i32) {
    %c0_i32 = arith.constant 0 : i32
    %c0_i32_0 = arith.constant 0 : i32
    %c0_i32_1 = arith.constant 0 : i32
    return %c0_i32, %c0_i32_0 : i32, i32
  }
  func.func @transform_1(%arg0: i32) -> (i32, i32, i32) {
    %c0_i32 = arith.constant 0 : i32
    %c0_i32_0 = arith.constant 0 : i32
    %c0_i32_1 = arith.constant 0 : i32
    return %c0_i32, %arg0, %c0_i32_0 : i32, i32, i32
  }
}

</mosaic_0001>

<llo_original>
// kernel: tpu_custom_call.1
$region0: #{tpu_custom_call.1}
  #allocation0 [shape = 'u32[]', space=smem, size = 0x4, offset = 0x4, fixed_abs, tag = 'smem constant byte address 0x4 - core index']
  #allocation1 [shape = 'u32[144,128]{1,0:T(1,128)}', space=vmem, size = 0x12000, scoped, tag = 'internal scratch']
  %s0 = inlined_call_operand.hbm [shape: s32[24,256], index: 0, kind: input, shape index: {}]
  %s1 = inlined_call_operand.hbm [shape: f32[4,16,128], index: 1, kind: output, shape index: {}]
  %s2 = sld [smem:[#allocation0]]
  $region18: #{tpu_custom_call.1} parent=0
    _
  %s4 = ssub.s32 1, %s2
  %s5 = scalar_select 0, %s4, %s2
  $region1: #{tpu_custom_call.1} parent=0
    #allocation2 [shape = 'u8[24576]{0}', space=vmem, size = 0x6000, scoped, tag = 'input window, operand 0, single buffered']
    #allocation3 [shape = 's32[1]{0}', space=sflag, size = 0x4, scoped, tag = 'scoped memory for tpu_custom_call.1']
    #allocation4 [shape = 's32[1]{0}', space=sflag, size = 0x4, scoped, tag = 'scoped memory for tpu_custom_call.1']
    #allocation5 [shape = 'u8[32768]{0}', space=vmem, size = 0x8000, scoped, tag = 'output window, operand 0, single buffered']
    %6 = vsyncpa [#allocation3], 0
    %7 = vsyncpa [#allocation4], 0
    // Predicated region
    $region2: #{tpu_custom_call.1} parent=1 // pred_check
      _
    $region3: #{tpu_custom_call.1} parent=1 // pred_check_branch
      %9 = sbr.rel (0) target = $region5
    $region4: #{tpu_custom_call.1} parent=1 // pred_region
      %s11 = ssub.s32 768, 768
      %12 = vsyncadd [#allocation3], %s11
      %s13 = sshll.u32 [#allocation2], 4
      %s14 = int_to_ptr.vmem [resolvable:$true] %s13
      %19 = dma.hbm_to_vmem [thread:$0]  %s0, 768, %s14, [#allocation3], 256, 256, 16
    $region5: #{tpu_custom_call.1} parent=1 // pred_fallthru
      _
    // Predicated region
    $region6: #{tpu_custom_call.1} parent=1 // pred_check
      _
    $region7: #{tpu_custom_call.1} parent=1 // pred_check_branch
      %21 = sbr.rel (0) target = $region9
    $region8: #{tpu_custom_call.1} parent=1 // pred_region
      %22 = dma.done [#allocation3], 768
    $region9: #{tpu_custom_call.1} parent=1 // pred_fallthru
      _
    %s23 = smul.u32 0, 16
    %s24 = sshra.s32 %s23, 3
    %s25 = sand.u32 %s23, 7
    %s26 = smul.u32 %s24, 2
    %s27 = smul.addr %s26, 8
    %s28 = scalar_lea.vmem [#allocation2], %s27
    %v29 = vld [vmem:[%s28] sm:$0xff]
    %v30 = vld [vmem:[%s28 + $0x8] sm:$0xff]
    %v31 = vld [vmem:[%s28 + $0x10] sm:$0xff]
    %v32 = vld [vmem:[%s28 + $0x18] sm:$0xff]
    %v33 = vld [vmem:[%s28 + $0x20] sm:$0x3]
    %v34 = vld [vmem:[%s28 + $0x28] sm:$0x3]
    %vm35 = vcmp.eq.s32.totalorder %v29, 10
    %vm36 = vcmp.eq.s32.totalorder %v30, 10
    %vm37 = vcmp.eq.s32.totalorder %v31, 10
    %vm38 = vcmp.eq.s32.totalorder %v32, 10
    %v39 = vsel %vm35, 0.8824969, 0.0
    %v40 = vsel %vm36, 0.8824969, 0.0
    %v41 = vsel %vm37, 0.8824969, 0.0
    %v42 = vsel %vm38, 0.8824969, 0.0
    %v43 = vadd.f32 %v39, 0.0
    %v44 = vadd.f32 %v40, 0.0
    %v45 = vadd.f32 %v41, 0.0
    %v46 = vadd.f32 %v42, 0.0
    %vm47 = vcmp.eq.s32.totalorder %v33, 10
    %v48 = vsel %vm47, 0.8824969, 0.0
    %vm52 = vcmask 1046528
    %v53 = vrot.slane %v39, 1
    %v54 = vrot.slane %v41, 1
    %v55 = vsel %vm52, %v53, %v54
    %v56 = vrot.slane %v48, 1
    %v57 = vsel %vm52, %v54, %v56
    %58 = vrot.lane.b32.xlu0 %v55, 1
    %v59 = vpop.permute.xlu0 %58
    %60 = vrot.lane.b32.xlu0 %v57, 1
    %v61 = vpop.permute.xlu0 %60
    %v64 = vadd.f32 %v43, %v59
    %v65 = vadd.f32 %v44, %v59
    %v66 = vadd.f32 %v45, %v61
    %v67 = vadd.f32 %v46, %v61
    %vm68 = vcmp.eq.s32.totalorder %v34, 10
    %v69 = vsel %vm68, 0.8824969, 0.0
    %v73 = vrot.slane %v40, 1
    %v74 = vrot.slane %v42, 1
    %v75 = vsel %vm52, %v73, %v74
    %v76 = vrot.slane %v69, 1
    %v77 = vsel %vm52, %v74, %v76
    %78 = vrot.lane.b32.xlu0 %v55, 127
    %v79 = vpop.permute.xlu0 %78
    %80 = vrot.lane.b32.xlu0 %v75, 127
    %v81 = vpop.permute.xlu0 %80
    %82 = vrot.lane.b32.xlu0 %v57, 127
    %v83 = vpop.permute.xlu0 %82
    %84 = vrot.lane.b32.xlu0 %v77, 127
    %v85 = vpop.permute.xlu0 %84
    %vm86 = vcmask 1039360
    %v87 = vsel %vm86, %v79, %v81
    %v88 = vsel %vm86, %v83, %v85
    %v93 = vadd.f32 %v64, %v87
    %v94 = vadd.f32 %v65, %v81
    %v95 = vadd.f32 %v66, %v88
    %v96 = vadd.f32 %v67, %v85
    %vm97 = vcmask 1045504
    %v98 = vrot.slane %v39, 2
    %v99 = vrot.slane %v41, 2
    %v100 = vsel %vm97, %v98, %v99
    %v101 = vrot.slane %v40, 2
    %v102 = vrot.slane %v42, 2
    %v103 = vsel %vm97, %v101, %v102
    %v104 = vrot.slane %v48, 2
    %v105 = vsel %vm97, %v99, %v104
    %v106 = vrot.slane %v69, 2
    %v107 = vsel %vm97, %v102, %v106
    %v112 = vadd.f32 %v93, %v100
    %v113 = vadd.f32 %v94, %v103
    %v114 = vadd.f32 %v95, %v105
    %v115 = vadd.f32 %v96, %v107
    %vm120 = vcmask 1040384
    %v121 = vrot.slane %v112, 7
    %v122 = vrot.slane %v113, 7
    %v123 = vrot.slane %v114, 7
    %v124 = vsel %vm120, %v121, %v123
    %v125 = vrot.slane %v115, 7
    %v126 = vsel %vm120, %v122, %v125
    %v133 = vsel %vm35, 3.971236, %v121
    %v134 = vsel %vm36, 3.971236, %v122
    %v135 = vsel %vm37, 3.971236, %v124
    %v136 = vsel %vm38, 3.971236, %v126
    %v137 = vsel %vm47, 3.971236, %v123
    %v138 = vsel %vm68, 3.971236, %v125
    %145 = vrot.lane.b32.xlu0 %v133, 127
    %v146 = vpop.permute.xlu0 %145
    %147 = vrot.lane.b32.xlu0 %v134, 127
    %v148 = vpop.permute.xlu0 %147
    %149 = vrot.lane.b32.xlu0 %v135, 127
    %v150 = vpop.permute.xlu0 %149
    %151 = vrot.lane.b32.xlu0 %v136, 127
    %v152 = vpop.permute.xlu0 %151
    %153 = vrot.lane.b32.xlu0 %v137, 127
    %v154 = vpop.permute.xlu0 %153
    %155 = vrot.lane.b32.xlu0 %v138, 127
    %v156 = vpop.permute.xlu0 %155
    %v157 = vsel %vm86, %v146, %v148
    %v158 = vsel %vm86, %v150, %v152
    %v159 = vsel %vm86, %v154, %v156
    %163 = vst [vmem:[#allocation5 - $0x1] sm:$0xfe] %v157
    %164 = vst [vmem:[#allocation5 + $0x7] sm:$0xff] %v158
    %165 = vst [vmem:[#allocation5 + $0xf] sm:$0x1] %v159
    %v166 = vadd.f32 %v133, 0.0
    %v167 = vadd.f32 %v134, 0.0
    %v168 = vadd.f32 %v135, 0.0
    %v169 = vadd.f32 %v136, 0.0
    %v170 = vadd.f32 %v137, 0.0
    %v171 = vadd.f32 %v138, 0.0
    %vm172 = vcmp.eq.s32.totalorder %v29, 20
    %vm173 = vcmp.eq.s32.totalorder %v30, 20
    %vm174 = vcmp.eq.s32.totalorder %v31, 20
    %vm175 = vcmp.eq.s32.totalorder %v32, 20
    %v176 = vsel %vm172, 0.8824969, 0.0
    %v177 = vsel %vm173, 0.8824969, 0.0
    %v178 = vsel %vm174, 0.8824969, 0.0
    %v179 = vsel %vm175, 0.8824969, 0.0
    %v180 = vadd.f32 %v176, 0.0
    %v181 = vadd.f32 %v177, 0.0
    %v182 = vadd.f32 %v178, 0.0
    %v183 = vadd.f32 %v179, 0.0
    %vm184 = vcmp.eq.s32.totalorder %v33, 20
    %v185 = vsel %vm184, 0.8824969, 0.0
    %v189 = vrot.slane %v176, 1
    %v190 = vrot.slane %v178, 1
    %v191 = vsel %vm52, %v189, %v190
    %v192 = vrot.slane %v185, 1
    %v193 = vsel %vm52, %v190, %v192
    %194 = vrot.lane.b32.xlu0 %v191, 1
    %v195 = vpop.permute.xlu0 %194
    %196 = vrot.lane.b32.xlu0 %v193, 1
    %v197 = vpop.permute.xlu0 %196
    %v200 = vadd.f32 %v180, %v195
    %v201 = vadd.f32 %v181, %v195
    %v202 = vadd.f32 %v182, %v197
    %v203 = vadd.f32 %v183, %v197
    %vm204 = vcmp.eq.s32.totalorder %v34, 20
    %v205 = vsel %vm204, 0.8824969, 0.0
    %v209 = vrot.slane %v177, 1
    %v210 = vrot.slane %v179, 1
    %v211 = vsel %vm52, %v209, %v210
    %v212 = vrot.slane %v205, 1
    %v213 = vsel %vm52, %v210, %v212
    %214 = vrot.lane.b32.xlu0 %v191, 127
    %v215 = vpop.permute.xlu0 %214
    %216 = vrot.lane.b32.xlu0 %v211, 127
    %v217 = vpop.permute.xlu0 %216
    %218 = vrot.lane.b32.xlu0 %v193, 127
    %v219 = vpop.permute.xlu0 %218
    %220 = vrot.lane.b32.xlu0 %v213, 127
    %v221 = vpop.permute.xlu0 %220
    %v222 = vsel %vm86, %v215, %v217
    %v223 = vsel %vm86, %v219, %v221
    %v228 = vadd.f32 %v200, %v222
    %v229 = vadd.f32 %v201, %v217
    %v230 = vadd.f32 %v202, %v223
    %v231 = vadd.f32 %v203, %v221
    %v232 = vrot.slane %v176, 2
    %v233 = vrot.slane %v178, 2
    %v234 = vsel %vm97, %v232, %v233
    %v235 = vrot.slane %v177, 2
    %v236 = vrot.slane %v179, 2
    %v237 = vsel %vm97, %v235, %v236
    %v238 = vrot.slane %v185, 2
    %v239 = vsel %vm97, %v233, %v238
    %v240 = vrot.slane %v205, 2
    %v241 = vsel %vm97, %v236, %v240
    %v246 = vadd.f32 %v228, %v234
    %v247 = vadd.f32 %v229, %v237
    %v248 = vadd.f32 %v230, %v239
    %v249 = vadd.f32 %v231, %v241
    %v254 = vrot.slane %v246, 7
    %v255 = vrot.slane %v247, 7
    %v256 = vrot.slane %v248, 7
    %v257 = vsel %vm120, %v254, %v256
    %v258 = vrot.slane %v249, 7
    %v259 = vsel %vm120, %v255, %v258
    %v266 = vsel %vm172, 3.971236, %v254
    %v267 = vsel %vm173, 3.971236, %v255
    %v268 = vsel %vm174, 3.971236, %v257
    %v269 = vsel %vm175, 3.971236, %v259
    %v270 = vsel %vm184, 3.971236, %v256
    %v271 = vsel %vm204, 3.971236, %v258
    %278 = vrot.lane.b32.xlu0 %v266, 127
    %v279 = vpop.permute.xlu0 %278
    %280 = vrot.lane.b32.xlu0 %v267, 127
    %v281 = vpop.permute.xlu0 %280
    %282 = vrot.lane.b32.xlu0 %v268, 127
    %v283 = vpop.permute.xlu0 %282
    %284 = vrot.lane.b32.xlu0 %v269, 127
    %v285 = vpop.permute.xlu0 %284
    %286 = vrot.lane.b32.xlu0 %v270, 127
    %v287 = vpop.permute.xlu0 %286
    %288 = vrot.lane.b32.xlu0 %v271, 127
    %v289 = vpop.permute.xlu0 %288
    %v290 = vsel %vm86, %v279, %v281
    %v291 = vsel %vm86, %v283, %v285
    %v292 = vsel %vm86, %v287, %v289
    %s296 = scalar_lea.vmem [#allocation5], 16
    %297 = vst [vmem:[%s296 - $0x1] sm:$0xfe] %v290
    %298 = vst [vmem:[%s296 + $0x7] sm:$0xff] %v291
    %299 = vst [vmem:[%s296 + $0xf] sm:$0x1] %v292
    %v300 = vadd.f32 %v166, %v266
    %v301 = vadd.f32 %v167, %v267
    %v302 = vadd.f32 %v168, %v268
    %v303 = vadd.f32 %v169, %v269
    %v304 = vadd.f32 %v170, %v270
    %v305 = vadd.f32 %v171, %v271
    %vm306 = vcmp.eq.s32.totalorder %v29, 30
    %vm307 = vcmp.eq.s32.totalorder %v30, 30
    %vm308 = vcmp.eq.s32.totalorder %v31, 30
    %vm309 = vcmp.eq.s32.totalorder %v32, 30
    %v310 = vsel %vm306, 0.8824969, 0.0
    %v311 = vsel %vm307, 0.8824969, 0.0
    %v312 = vsel %vm308, 0.8824969, 0.0
    %v313 = vsel %vm309, 0.8824969, 0.0
    %v314 = vadd.f32 %v310, 0.0
    %v315 = vadd.f32 %v311, 0.0
    %v316 = vadd.f32 %v312, 0.0
    %v317 = vadd.f32 %v313, 0.0
    %vm318 = vcmp.eq.s32.totalorder %v33, 30
    %v319 = vsel %vm318, 0.8824969, 0.0
    %v323 = vrot.slane %v310, 1
    %v324 = vrot.slane %v312, 1
    %v325 = vsel %vm52, %v323, %v324
    %v326 = vrot.slane %v319, 1
    %v327 = vsel %vm52, %v324, %v326
    %328 = vrot.lane.b32.xlu0 %v325, 1
    %v329 = vpop.permute.xlu0 %328
    %330 = vrot.lane.b32.xlu0 %v327, 1
    %v331 = vpop.permute.xlu0 %330
    %v334 = vadd.f32 %v314, %v329
    %v335 = vadd.f32 %v315, %v329
    %v336 = vadd.f32 %v316, %v331
    %v337 = vadd.f32 %v317, %v331
    %vm338 = vcmp.eq.s32.totalorder %v34, 30
    %v339 = vsel %vm338, 0.8824969, 0.0
    %v343 = vrot.slane %v311, 1
    %v344 = vrot.slane %v313, 1
    %v345 = vsel %vm52, %v343, %v344
    %v346 = vrot.slane %v339, 1
    %v347 = vsel %vm52, %v344, %v346
    %348 = vrot.lane.b32.xlu0 %v325, 127
    %v349 = vpop.permute.xlu0 %348
    %350 = vrot.lane.b32.xlu0 %v345, 127
    %v351 = vpop.permute.xlu0 %350
    %352 = vrot.lane.b32.xlu0 %v327, 127
    %v353 = vpop.permute.xlu0 %352
    %354 = vrot.lane.b32.xlu0 %v347, 127
    %v355 = vpop.permute.xlu0 %354
    %v356 = vsel %vm86, %v349, %v351
    %v357 = vsel %vm86, %v353, %v355
    %v362 = vadd.f32 %v334, %v356
    %v363 = vadd.f32 %v335, %v351
    %v364 = vadd.f32 %v336, %v357
    %v365 = vadd.f32 %v337, %v355
    %v366 = vrot.slane %v310, 2
    %v367 = vrot.slane %v312, 2
    %v368 = vsel %vm97, %v366, %v367
    %v369 = vrot.slane %v311, 2
    %v370 = vrot.slane %v313, 2
    %v371 = vsel %vm97, %v369, %v370
    %v372 = vrot.slane %v319, 2
    %v373 = vsel %vm97, %v367, %v372
    %v374 = vrot.slane %v339, 2
    %v375 = vsel %vm97, %v370, %v374
    %v380 = vadd.f32 %v362, %v368
    %v381 = vadd.f32 %v363, %v371
    %v382 = vadd.f32 %v364, %v373
    %v383 = vadd.f32 %v365, %v375
    %v388 = vrot.slane %v380, 7
    %v389 = vrot.slane %v381, 7
    %v390 = vrot.slane %v382, 7
    %v391 = vsel %vm120, %v388, %v390
    %v392 = vrot.slane %v383, 7
    %v393 = vsel %vm120, %v389, %v392
    %v400 = vsel %vm306, 3.971236, %v388
    %v401 = vsel %vm307, 3.971236, %v389
    %v402 = vsel %vm308, 3.971236, %v391
    %v403 = vsel %vm309, 3.971236, %v393
    %v404 = vsel %vm318, 3.971236, %v390
    %v405 = vsel %vm338, 3.971236, %v392
    %412 = vrot.lane.b32.xlu0 %v400, 127
    %v413 = vpop.permute.xlu0 %412
    %414 = vrot.lane.b32.xlu0 %v401, 127
    %v415 = vpop.permute.xlu0 %414
    %416 = vrot.lane.b32.xlu0 %v402, 127
    %v417 = vpop.permute.xlu0 %416
    %418 = vrot.lane.b32.xlu0 %v403, 127
    %v419 = vpop.permute.xlu0 %418
    %420 = vrot.lane.b32.xlu0 %v404, 127
    %v421 = vpop.permute.xlu0 %420
    %422 = vrot.lane.b32.xlu0 %v405, 127
    %v423 = vpop.permute.xlu0 %422
    %v424 = vsel %vm86, %v413, %v415
    %v425 = vsel %vm86, %v417, %v419
    %v426 = vsel %vm86, %v421, %v423
    %s430 = scalar_lea.vmem [#allocation5], 32
    %431 = vst [vmem:[%s430 - $0x1] sm:$0xfe] %v424
    %432 = vst [vmem:[%s430 + $0x7] sm:$0xff] %v425
    %433 = vst [vmem:[%s430 + $0xf] sm:$0x1] %v426
    %v434 = vadd.f32 %v300, %v400
    %v435 = vadd.f32 %v301, %v401
    %v436 = vadd.f32 %v302, %v402
    %v437 = vadd.f32 %v303, %v403
    %v438 = vadd.f32 %v304, %v404
    %v439 = vadd.f32 %v305, %v405
    %vm440 = vcmp.eq.s32.totalorder %v29, 40
    %vm441 = vcmp.eq.s32.totalorder %v30, 40
    %vm442 = vcmp.eq.s32.totalorder %v31, 40
    %vm443 = vcmp.eq.s32.totalorder %v32, 40
    %v444 = vsel %vm440, 0.8824969, 0.0
    %v445 = vsel %vm441, 0.8824969, 0.0
    %v446 = vsel %vm442, 0.8824969, 0.0
    %v447 = vsel %vm443, 0.8824969, 0.0
    %v448 = vadd.f32 %v444, 0.0
    %v449 = vadd.f32 %v445, 0.0
    %v450 = vadd.f32 %v446, 0.0
    %v451 = vadd.f32 %v447, 0.0
    %vm452 = vcmp.eq.s32.totalorder %v33, 40
    %v453 = vsel %vm452, 0.8824969, 0.0
    %v457 = vrot.slane %v444, 1
    %v458 = vrot.slane %v446, 1
    %v459 = vsel %vm52, %v457, %v458
    %v460 = vrot.slane %v453, 1
    %v461 = vsel %vm52, %v458, %v460
    %462 = vrot.lane.b32.xlu0 %v459, 1
    %v463 = vpop.permute.xlu0 %462
    %464 = vrot.lane.b32.xlu0 %v461, 1
    %v465 = vpop.permute.xlu0 %464
    %v468 = vadd.f32 %v448, %v463
    %v469 = vadd.f32 %v449, %v463
    %v470 = vadd.f32 %v450, %v465
    %v471 = vadd.f32 %v451, %v465
    %vm472 = vcmp.eq.s32.totalorder %v34, 40
    %v473 = vsel %vm472, 0.8824969, 0.0
    %v477 = vrot.slane %v445, 1
    %v478 = vrot.slane %v447, 1
    %v479 = vsel %vm52, %v477, %v478
    %v480 = vrot.slane %v473, 1
    %v481 = vsel %vm52, %v478, %v480
    %482 = vrot.lane.b32.xlu0 %v459, 127
    %v483 = vpop.permute.xlu0 %482
    %484 = vrot.lane.b32.xlu0 %v479, 127
    %v485 = vpop.permute.xlu0 %484
    %486 = vrot.lane.b32.xlu0 %v461, 127
    %v487 = vpop.permute.xlu0 %486
    %488 = vrot.lane.b32.xlu0 %v481, 127
    %v489 = vpop.permute.xlu0 %488
    %v490 = vsel %vm86, %v483, %v485
    %v491 = vsel %vm86, %v487, %v489
    %v496 = vadd.f32 %v468, %v490
    %v497 = vadd.f32 %v469, %v485
    %v498 = vadd.f32 %v470, %v491
    %v499 = vadd.f32 %v471, %v489
    %v500 = vrot.slane %v444, 2
    %v501 = vrot.slane %v446, 2
    %v502 = vsel %vm97, %v500, %v501
    %v503 = vrot.slane %v445, 2
    %v504 = vrot.slane %v447, 2
    %v505 = vsel %vm97, %v503, %v504
    %v506 = vrot.slane %v453, 2
    %v507 = vsel %vm97, %v501, %v506
    %v508 = vrot.slane %v473, 2
    %v509 = vsel %vm97, %v504, %v508
    %v514 = vadd.f32 %v496, %v502
    %v515 = vadd.f32 %v497, %v505
    %v516 = vadd.f32 %v498, %v507
    %v517 = vadd.f32 %v499, %v509
    %v522 = vrot.slane %v514, 7
    %v523 = vrot.slane %v515, 7
    %v524 = vrot.slane %v516, 7
    %v525 = vsel %vm120, %v522, %v524
    %v526 = vrot.slane %v517, 7
    %v527 = vsel %vm120, %v523, %v526
    %v534 = vsel %vm440, 3.971236, %v522
    %v535 = vsel %vm441, 3.971236, %v523
    %v536 = vsel %vm442, 3.971236, %v525
    %v537 = vsel %vm443, 3.971236, %v527
    %v538 = vsel %vm452, 3.971236, %v524
    %v539 = vsel %vm472, 3.971236, %v526
    %546 = vrot.lane.b32.xlu0 %v534, 127
    %v547 = vpop.permute.xlu0 %546
    %548 = vrot.lane.b32.xlu0 %v535, 127
    %v549 = vpop.permute.xlu0 %548
    %550 = vrot.lane.b32.xlu0 %v536, 127
    %v551 = vpop.permute.xlu0 %550
    %552 = vrot.lane.b32.xlu0 %v537, 127
    %v553 = vpop.permute.xlu0 %552
    %554 = vrot.lane.b32.xlu0 %v538, 127
    %v555 = vpop.permute.xlu0 %554
    %556 = vrot.lane.b32.xlu0 %v539, 127
    %v557 = vpop.permute.xlu0 %556
    %v558 = vsel %vm86, %v547, %v549
    %v559 = vsel %vm86, %v551, %v553
    %v560 = vsel %vm86, %v555, %v557
    %s564 = scalar_lea.vmem [#allocation5], 48
    %565 = vst [vmem:[%s564 - $0x1] sm:$0xfe] %v558
    %566 = vst [vmem:[%s564 + $0x7] sm:$0xff] %v559
    %567 = vst [vmem:[%s564 + $0xf] sm:$0x1] %v560
    %v568 = vadd.f32 %v434, %v534
    %v569 = vadd.f32 %v435, %v535
    %v570 = vadd.f32 %v436, %v536
    %v571 = vadd.f32 %v437, %v537
    %v572 = vadd.f32 %v438, %v538
    %v573 = vadd.f32 %v439, %v539
    %v574 = vmax.f32 %v568, 1e-07
    %v575 = vmax.f32 %v569, 1e-07
    %v576 = vmax.f32 %v570, 1e-07
    %v577 = vmax.f32 %v571, 1e-07
    %v578 = vmax.f32 %v572, 1e-07
    %v579 = vmax.f32 %v573, 1e-07
    %v580 = vrcp.pop %v574
    %v581 = vrcp.pop %v575
    %v582 = vrcp.pop %v576
    %v583 = vrcp.pop %v577
    %v584 = vrcp.pop %v578
    %v585 = vrcp.pop %v579
    %v586 = vld [vmem:[#allocation5] sm:$0xff]
    %v587 = vld [vmem:[#allocation5 + $0x8] sm:$0xff]
    %v594 = vrot.slane %v580, 1
    %v595 = vrot.slane %v582, 1
    %v596 = vsel %vm52, %v594, %v595
    %v597 = vrot.slane %v581, 1
    %v598 = vrot.slane %v583, 1
    %v599 = vsel %vm52, %v597, %v598
    %v600 = vrot.slane %v584, 1
    %v601 = vsel %vm52, %v595, %v600
    %v602 = vrot.slane %v585, 1
    %v603 = vsel %vm52, %v598, %v602
    %604 = vrot.lane.b32.xlu0 %v596, 127
    %v605 = vpop.permute.xlu0 %604
    %606 = vrot.lane.b32.xlu0 %v599, 127
    %v607 = vpop.permute.xlu0 %606
    %608 = vrot.lane.b32.xlu0 %v601, 127
    %v609 = vpop.permute.xlu0 %608
    %610 = vrot.lane.b32.xlu0 %v603, 127
    %v611 = vpop.permute.xlu0 %610
    %v612 = vsel %vm86, %v605, %v607
    %v613 = vsel %vm86, %v609, %v611
    %v616 = vmul.f32 %v586, %v612
    %v617 = vmul.f32 %v587, %v613
    %618 = vst [vmem:[#allocation5] sm:$0xff] %v616
    %619 = vst [vmem:[#allocation5 + $0x8] sm:$0xff] %v617
    %v620 = vld [vmem:[%s296] sm:$0xff]
    %v621 = vld [vmem:[%s296 + $0x8] sm:$0xff]
    %v622 = vmul.f32 %v620, %v612
    %v623 = vmul.f32 %v621, %v613
    %624 = vst [vmem:[%s296] sm:$0xff] %v622
    %625 = vst [vmem:[%s296 + $0x8] sm:$0xff] %v623
    %v626 = vld [vmem:[%s430] sm:$0xff]
    %v627 = vld [vmem:[%s430 + $0x8] sm:$0xff]
    %v628 = vmul.f32 %v626, %v612
    %v629 = vmul.f32 %v627, %v613
    %630 = vst [vmem:[%s430] sm:$0xff] %v628
    %631 = vst [vmem:[%s430 + $0x8] sm:$0xff] %v629
    %v632 = vld [vmem:[%s564] sm:$0xff]
    %v633 = vld [vmem:[%s564 + $0x8] sm:$0xff]
    %v634 = vmul.f32 %v632, %v612
    %v635 = vmul.f32 %v633, %v613
    %636 = vst [vmem:[%s564] sm:$0xff] %v634
    %637 = vst [vmem:[%s564 + $0x8] sm:$0xff] %v635
    // Predicated region
    $region10: #{tpu_custom_call.1} parent=1 // pred_check
      _
    $region11: #{tpu_custom_call.1} parent=1 // pred_check_branch
      %639 = sbr.rel (0) target = $region13
    $region12: #{tpu_custom_call.1} parent=1 // pred_region
      %s641 = ssub.s32 1024, 1024
      %642 = vsyncadd [#allocation4], %s641
      %s643 = sshll.u32 [#allocation5], 4
      %s644 = int_to_ptr.vmem [resolvable:$true] %s643
      %649 = dma.vmem_to_hbm [thread:$0]  %s644, 1024, %s1, [#allocation4], 128, 128, 8
    $region13: #{tpu_custom_call.1} parent=1 // pred_fallthru
      _
    // Predicated region
    $region14: #{tpu_custom_call.1} parent=1 // pred_check
      _
    $region15: #{tpu_custom_call.1} parent=1 // pred_check_branch
      %651 = sbr.rel (0) target = $region17
    $region16: #{tpu_custom_call.1} parent=1 // pred_region
      %652 = dma.done [#allocation4], 1024
    $region17: #{tpu_custom_call.1} parent=1 // pred_fallthru
      _
    %653 = vsyncpa [#allocation3], 1
    %654 = vsyncpa [#allocation4], 1

</llo_original>
